<compile_context>
chip_gen: v6e
topology: v6e:2x2x1
jax: 0.10.0
libtpu: 0.0.40
codegen_flags: <defaults>
</compile_context>

<pallas_src>
import jax
import jax.numpy as jnp
from jax.experimental import pallas as pl
from jax.experimental.pallas import tpu as pltpu


def _mul2_add1_kernel(x_ref, o_ref):
    # Elementwise hot path: result = x * 2 + 1 (one vmul + one vadd per vreg).
    o_ref[...] = x_ref[...] * 2 + 1


def _sublane_multiple(dtype) -> int:
    itemsize = jnp.dtype(dtype).itemsize
    if itemsize >= 4:
        return 8
    if itemsize == 2:
        return 16
    return 32


# Per-buffer VMEM budget. 4 buffers (double-buffered input + output) ~= 8 MiB.
_TARGET_BLOCK_BYTES = 2 * 1024 * 1024
# Scoped VMEM limit requested from Mosaic: generous headroom on all chips
# (< 64 MiB physical on v7x, < 128 MiB on v5e/v6e).
_VMEM_LIMIT_BYTES = 32 * 1024 * 1024


def _launch_elementwise(x2d, block_rows, cols, num_blocks):
    return pl.pallas_call(
        _mul2_add1_kernel,
        out_shape=jax.ShapeDtypeStruct(x2d.shape, x2d.dtype),
        grid=(num_blocks,),
        in_specs=[pl.BlockSpec((block_rows, cols), lambda i: (i, 0))],
        out_specs=pl.BlockSpec((block_rows, cols), lambda i: (i, 0)),
        compiler_params=pltpu.CompilerParams(
            dimension_semantics=("parallel",),
            vmem_limit_bytes=_VMEM_LIMIT_BYTES,
        ),
    )(x2d)


def _choose_block_rows(rows, cols, dtype):
    sub = _sublane_multiple(dtype)
    itemsize = jnp.dtype(dtype).itemsize
    target_elems = max(1, _TARGET_BLOCK_BYTES // itemsize)
    # Largest multiple of the sublane packing that keeps a block near the byte budget.
    br_target = max(sub, (target_elems // cols) // sub * sub)
    # If the whole array fits in one target block, use the full row extent
    # (full-extent block dims are always layout-legal, even if not 8-aligned).
    return rows if rows <= br_target else br_target


def pt_module_forward(x):
    """Elementwise (x * 2 + 1) with the same shape/dtype as the input."""
    orig_shape = x.shape
    n = x.size
    itemsize = jnp.dtype(x.dtype).itemsize

    # Prefer the widest lane-dense column count that divides the flat size exactly,
    # so no padding and no post-slice are needed (zero extra HBM traffic).
    cols = None
    for c in (8192, 4096, 2048, 1024, 512, 256, 128):
        if n % c == 0:
            cols = c
            break

    if cols is not None:
        rows = n // cols
        block_rows = _choose_block_rows(rows, cols, x.dtype)
        num_blocks = pl.cdiv(rows, block_rows)
        x2d = x.reshape(rows, cols)  # contiguous reshape: no data movement
        out2d = _launch_elementwise(x2d, block_rows, cols, num_blocks)
        return out2d.reshape(orig_shape)

    # Odd flat size that still fits in a single VMEM block: single full-extent
    # (1, n) block, still no padding / no post-slice.
    if n * itemsize <= _TARGET_BLOCK_BYTES:
        out2d = _launch_elementwise(x.reshape(1, n), 1, n, 1)
        return out2d.reshape(orig_shape)

    # Fallback for large flat sizes not divisible by 128: pad to a lane-dense
    # 2D view, run tiled, and slice the result back.
    cols = 512
    rows = pl.cdiv(n, cols)
    block_rows = _choose_block_rows(rows, cols, x.dtype)
    num_blocks = pl.cdiv(rows, block_rows)
    padded = rows * cols
    x_flat = jnp.pad(jnp.ravel(x), (0, padded - n))
    out2d = _launch_elementwise(x_flat.reshape(rows, cols), block_rows, cols, num_blocks)
    return out2d.reshape(-1)[:n].reshape(orig_shape)


if __name__ == "__main__":
    key = jax.random.PRNGKey(0)
    # Small shape consistent with a generic 4D tensor input (NCHW).
    x = jax.random.normal(key, (2, 4, 16, 16), dtype=jnp.float32)

    fwd = jax.jit(pt_module_forward)
    out = fwd(x)
    out = jax.block_until_ready(out)

    # Reference check against pure-JAX semantics of the PyTorch module.
    ref = x * 2 + 1
    assert out.shape == x.shape and out.dtype == x.dtype
    assert jnp.allclose(out, ref, atol=1e-6), "mismatch vs reference"

    print("KERNEL_OK")
</pallas_src>

<mosaic_0001>
module attributes {stable_mosaic.version = 11 : i64} {
  func.func @_mul2_add1_kernel(%arg0: i32, %arg1: memref<1x2048xf32, #tpu.memory_space<vmem>>, %arg2: memref<1x2048xf32, #tpu.memory_space<vmem>>) attributes {dimension_semantics = [#tpu.dimension_semantics<parallel>], iteration_bounds = array<i64: 1>, scalar_prefetch = 0 : i64, scratch_operands = 0 : i64, tpu.core_type = #tpu.core_type<tc>, window_params = [{transform_indices = @transform_0, window_bounds = array<i64: 1, 2048>}, {transform_indices = @transform_1, window_bounds = array<i64: 1, 2048>}]} {
    %c0 = arith.constant 0 : index
    %c0_0 = arith.constant 0 : index
    %0 = vector.load %arg1[%c0, %c0_0] : memref<1x2048xf32, #tpu.memory_space<vmem>>, vector<1x2048xf32>
    %cst = arith.constant 2.000000e+00 : f32
    %1 = vector.broadcast %cst : f32 to vector<1x2048xf32>
    %2 = arith.mulf %0, %1 : vector<1x2048xf32>
    %cst_1 = arith.constant 1.000000e+00 : f32
    %3 = vector.broadcast %cst_1 : f32 to vector<1x2048xf32>
    %4 = arith.addf %2, %3 : vector<1x2048xf32>
    %c0_2 = arith.constant 0 : index
    %c0_3 = arith.constant 0 : index
    %5 = vector.load %arg2[%c0_2, %c0_3] : memref<1x2048xf32, #tpu.memory_space<vmem>>, vector<1x2048xf32>
    tpu.vector_store %arg2[%c0_2, %c0_3], %4 {strides = array<i32>} : memref<1x2048xf32, #tpu.memory_space<vmem>>, vector<1x2048xf32>,
    return
  }
  func.func @transform_0(%arg0: i32) -> (i32, i32) {
    %c0_i32 = arith.constant 0 : i32
    %c0_i32_0 = arith.constant 0 : i32
    return %arg0, %c0_i32 : i32, i32
  }
  func.func @transform_1(%arg0: i32) -> (i32, i32) {
    %c0_i32 = arith.constant 0 : i32
    %c0_i32_0 = arith.constant 0 : i32
    return %arg0, %c0_i32 : i32, i32
  }
}

</mosaic_0001>

<llo_original>
// kernel: pt_module_forward.1
$region0: #{pt_module_forward.1}
  #allocation0 [shape = 'u32[]', space=smem, size = 0x4, offset = 0x4, fixed_abs, tag = 'smem constant byte address 0x4 - core index']
  #allocation1 [shape = 'u32[144,128]{1,0:T(1,128)}', space=vmem, size = 0x12000, scoped, tag = 'internal scratch']
  %s0 = inlined_call_operand.vmem [shape: f32[1,2048], index: 0, kind: input, shape index: {}]
  %s1 = inlined_call_operand.vmem [shape: f32[1,2048], index: 1, kind: output, shape index: {}]
  %s2 = sld [smem:[#allocation0]]
  $region14: #{pt_module_forward.1} parent=0
    _
  %s4 = ssub.s32 1, %s2
  %s5 = scalar_select 0, %s4, %s2
  // Predicated region
  $region2: #{pt_module_forward.1} parent=0 // pred_check
    _
  $region3: #{pt_module_forward.1} parent=0 // pred_check_branch
    %7 = sbr.rel (0) target = $region5
  $region4: #{pt_module_forward.1} parent=0 // pred_region
    _
  $region5: #{pt_module_forward.1} parent=0 // pred_fallthru
    _
  %v8 = vld [vmem:[%s0] sm:$0xff]
  %v9 = vld [vmem:[%s0 + $0x8] sm:$0xff]
  %v10 = vmul.f32 %v8, 2.0
  %v11 = vmul.f32 %v9, 2.0
  %v12 = vadd.f32 %v10, 1.0
  %v13 = vadd.f32 %v11, 1.0
  %14 = vst [vmem:[%s1] sm:$0xff] %v12
  %15 = vst [vmem:[%s1 + $0x8] sm:$0xff] %v13
  // Predicated region
  $region6: #{pt_module_forward.1} parent=0 // pred_check
    _
  $region7: #{pt_module_forward.1} parent=0 // pred_check_branch
    %17 = sbr.rel (0) target = $region9
  $region8: #{pt_module_forward.1} parent=0 // pred_region
    _
  $region9: #{pt_module_forward.1} parent=0 // pred_fallthru
    _
  // Predicated region
  $region10: #{pt_module_forward.1} parent=0 // pred_check
    _
  $region11: #{pt_module_forward.1} parent=0 // pred_check_branch
    %19 = sbr.rel (0) target = $region13
  $region12: #{pt_module_forward.1} parent=0 // pred_region
    _
  $region13: #{pt_module_forward.1} parent=0 // pred_fallthru
    _

</llo_original>
